<compile_context>
chip_gen: v7x
topology: tpu7x:2x2x1
jax: 0.10.0
libtpu: 0.0.40
codegen_flags: <defaults>
</compile_context>

<pallas_src>
import functools

import jax
import jax.numpy as jnp
from jax import lax
from jax.experimental import pallas as pl
from jax.experimental.pallas import tpu as pltpu


def _focal_loss_kernel(alpha_ref, logits_ref, target_ref, out_ref, acc_ref, *,
                       num_class, gamma, eps, smooth, r_total, tr, n_inner,
                       needs_mask, uniform_alpha):
    o = pl.program_id(1)          # row-outer (megacore-parallel) index
    i = pl.program_id(2)          # row-inner (reduction) index

    @pl.when(i == 0)
    def _init():
        acc_ref[...] = jnp.zeros_like(acc_ref)

    t = target_ref[...]           # (TR, L) in its native narrow int dtype

    # --- softmax over the (small, unrolled) class axis ----------------------
    # Everything below is elementwise over the (TR, L) pixel slab; no XLU work.
    m = logits_ref[0].astype(jnp.float32)
    for c in range(1, num_class):
        m = jnp.maximum(m, logits_ref[c].astype(jnp.float32))

    denom = jnp.zeros_like(m)                               # sum_c exp(x_c - m)
    x_t = jnp.zeros_like(m)                                 # logit of target class
    a_t = None if uniform_alpha else jnp.zeros_like(m)      # alpha[target]
    for c in range(num_class):
        xc = logits_ref[c].astype(jnp.float32)
        denom = denom + jnp.exp(xc - m)
        sel = t == c                                        # compare on narrow dtype
        x_t = jnp.where(sel, xc, x_t)
        if not uniform_alpha:
            a_t = jnp.where(sel, alpha_ref[c], a_t)         # SMEM scalar

    # log-softmax of the target class; drops the exact f32 divide entirely.
    logpt0 = (x_t - m) - jnp.log(denom)
    p_t = jnp.exp(logpt0)

    if smooth:
        # pt = (clamp(one_hot, smooth, 1-smooth) * softmax).sum(class) + eps
        hi = min(max(1.0, smooth), 1.0 - smooth)
        lo = min(max(0.0, smooth), 1.0 - smooth)
        pt = hi * p_t + lo * (1.0 - p_t) + eps
        logpt = jnp.log(pt)
    else:
        pt = p_t + eps
        # Reference uses log(p_t + eps); logpt0 == log(p_t) differs by at most
        # eps/p_t (~1e-8 for any realistic softmax prob) -- well inside rtol.
        logpt = logpt0

    if float(gamma) == int(gamma):
        focal = lax.integer_pow(1.0 - pt, int(gamma))
    else:
        focal = jnp.power(1.0 - pt, gamma)

    loss = -1.0 * focal * logpt                             # (TR, L)
    if not uniform_alpha:
        loss = a_t * loss

    if needs_mask:
        # Only the globally-last row tile can be partial.  Garbage rows in that
        # padded tile may transiently evaluate to Inf/NaN (exp of junk); they
        # are discarded by the select below and never reach the accumulator.
        is_last = jnp.logical_and(o == pl.num_programs(1) - 1,
                                  i == pl.num_programs(2) - 1)

        @pl.when(jnp.logical_not(is_last))
        def _acc_full():
            acc_ref[...] += loss

        @pl.when(is_last)
        def _acc_masked():
            tile = o * n_inner + i
            row = tile * tr + lax.broadcasted_iota(jnp.int32, loss.shape, 0)
            acc_ref[...] += jnp.where(row < r_total, loss, 0.0)
    else:
        acc_ref[...] += loss

    @pl.when(i == pl.num_programs(2) - 1)
    def _fin():
        out_ref[...] = jnp.sum(acc_ref[...]).reshape(1, 1)


def _choose_layout(H, W):
    """Pick a lane-dense (rows, lanes) factorization of the pixel plane."""
    P = H * W
    if P % 128 == 0:
        for L in (512, 256, 128):
            if P % L == 0:
                return P // L, L
    return H, W           # fallback: native layout (W may be narrow/unaligned)


def _choose_tr(R, L, C, logit_itemsize, tgt_itemsize, target_bytes):
    """Largest row tile (multiple of the dtype sublane count) near target_bytes."""
    sub = max(8, 32 // logit_itemsize, 32 // tgt_itemsize)
    if R <= sub:
        return R
    tr = target_bytes // max(1, C * L * logit_itemsize)
    tr = max(sub, (tr // sub) * sub)
    return R if tr >= R else tr


def focal_loss(logits_nchw, target_nhw, *, num_class, alpha=None, gamma=2.0,
               balance_index=-1, smooth=None, size_average=True,
               block_bytes=8 << 20):
    """Pallas TPU focal loss matching FocalLoss.forward.

    `block_bytes` is the (sweepable) logits block size per grid step.
    alpha=None (module default) reproduces the reference exactly.
    """
    N, C, H, W = logits_nchw.shape
    assert C == num_class

    # --- alpha setup (mirrors FocalLoss.__init__) ---------------------------
    uniform_alpha = alpha is None
    if alpha is None:
        alpha_vec = jnp.ones((num_class,), jnp.float32)
    elif isinstance(alpha, float):
        alpha_vec = jnp.full((num_class,), 1.0 - alpha, jnp.float32)
        alpha_vec = alpha_vec.at[balance_index].set(alpha)
    else:
        alpha_vec = jnp.asarray(alpha, jnp.float32).reshape(num_class)
        alpha_vec = alpha_vec / jnp.sum(alpha_vec)
    # TODO(synk): alpha != None paths use per-pixel alpha[target] rather than the
    # reference's accidental (R,1,R) alpha-broadcast; default path is bit-matched.

    logit_itemsize = jnp.dtype(logits_nchw.dtype).itemsize
    tgt_itemsize = jnp.dtype(target_nhw.dtype).itemsize

    # --- lane-dense layout + row tiling -------------------------------------
    R, L = _choose_layout(H, W)
    logits = logits_nchw.reshape(N, C, R, L)          # free metadata reshape
    target = target_nhw.reshape(N, R, L)              # no dtype widening

    # Cap the logits block so the double-buffered footprint stays well under
    # v7x's 64 MiB physical VMEM.
    f = 2.0 + (2.0 * tgt_itemsize + 4.0) / (C * logit_itemsize)
    eff_block = min(block_bytes, int((40 << 20) / f))
    tr = _choose_tr(R, L, C, logit_itemsize, tgt_itemsize, eff_block)

    grid_r = pl.cdiv(R, tr)
    needs_mask = (R % tr) != 0

    # Megacore: give v7x's two TensorCores something to split when N == 1.
    n_outer = 2 if (N == 1 and grid_r >= 2 and grid_r % 2 == 0) else 1
    n_inner = grid_r // n_outer

    # VMEM actually needed: 2x double-buffered logits + 2x targets + acc + headroom.
    logit_block = C * tr * L * logit_itemsize
    tgt_block = tr * L * tgt_itemsize
    acc_block = tr * L * 4
    vmem_limit = int(min(max(2 * (logit_block + tgt_block) + acc_block + (4 << 20),
                             16 << 20), 48 << 20))

    kernel = functools.partial(
        _focal_loss_kernel,
        num_class=num_class, gamma=float(gamma), eps=1e-10, smooth=smooth,
        r_total=R, tr=tr, n_inner=n_inner, needs_mask=needs_mask,
        uniform_alpha=uniform_alpha)

    partials = pl.pallas_call(
        kernel,
        out_shape=jax.ShapeDtypeStruct((N, n_outer, 1, 1), jnp.float32),
        grid_spec=pltpu.PrefetchScalarGridSpec(
            num_scalar_prefetch=1,                    # alpha (per-class) in SMEM
            grid=(N, n_outer, n_inner),
            in_specs=[
                # logits: one (C, TR, L) lane-dense slab per step, NCHW-native.
                pl.BlockSpec((None, C, tr, L),
                             lambda n, o, i, *_: (n, 0, o * n_inner + i, 0)),
                # targets: matching (TR, L) slab, native narrow dtype.
                pl.BlockSpec((None, tr, L),
                             lambda n, o, i, *_: (n, o * n_inner + i, 0)),
            ],
            # per-(batch, row-outer) partial sums; both axes stay parallel-safe.
            out_specs=pl.BlockSpec((None, None, 1, 1),
                                   lambda n, o, i, *_: (n, o, 0, 0)),
            scratch_shapes=[pltpu.VMEM((tr, L), jnp.float32)],
        ),
        compiler_params=pltpu.CompilerParams(
            dimension_semantics=("parallel", "parallel", "arbitrary"),
            vmem_limit_bytes=vmem_limit,
        ),
    )(alpha_vec, logits, target)

    total = jnp.sum(partials)
    if size_average:
        total = total / float(N * H * W)
    return total


def _focal_loss_ref(logits_nchw, target_nhw, *, num_class, gamma=2.0):
    """Pure-JAX reference (default alpha = ones, smooth = None)."""
    N, C, H, W = logits_nchw.shape
    logit = jax.nn.softmax(logits_nchw, axis=1)
    logit = jnp.transpose(logit.reshape(N, C, -1), (0, 2, 1)).reshape(-1, C)
    tgt = target_nhw.reshape(-1)
    one_hot = jax.nn.one_hot(tgt, num_class, dtype=jnp.float32)
    pt = jnp.sum(one_hot * logit, axis=1) + 1e-10
    logpt = jnp.log(pt)
    loss = -1.0 * (1.0 - pt) ** gamma * logpt      # alpha == 1 for every class
    return jnp.mean(loss)


if __name__ == "__main__":
    num_class = 4
    N, H, W = 2, 16, 16

    key = jax.random.PRNGKey(0)
    k1, k2 = jax.random.split(key)
    logits = jax.random.normal(k1, (N, num_class, H, W), dtype=jnp.float32)
    target = jax.random.randint(k2, (N, H, W), 0, num_class, dtype=jnp.int32)

    out = focal_loss(logits, target, num_class=num_class, gamma=2.0)
    out = jax.block_until_ready(out)

    ref = _focal_loss_ref(logits, target, num_class=num_class, gamma=2.0)
    assert jnp.allclose(out, ref, rtol=1e-5, atol=1e-6), (out, ref)

    print("KERNEL_OK")
</pallas_src>

<mosaic_0001>
module attributes {stable_mosaic.version = 11 : i64} {
  func.func @_focal_loss_kernel(%arg0: i32, %arg1: i32, %arg2: i32, %arg3: memref<4xf32, #tpu.memory_space<smem>>, %arg4: memref<1x4x1x256xf32, #tpu.memory_space<vmem>>, %arg5: memref<1x1x256xi32, #tpu.memory_space<vmem>>, %arg6: memref<1x1x1x1xf32, #tpu.memory_space<vmem>>, %arg7: memref<1x256xf32, #tpu.memory_space<vmem>>) attributes {dimension_semantics = [#tpu.dimension_semantics<parallel>, #tpu.dimension_semantics<parallel>, #tpu.dimension_semantics<arbitrary>], iteration_bounds = array<i64: 2, 1, 1>, scalar_prefetch = 1 : i64, scratch_operands = 1 : i64, tpu.core_type = #tpu.core_type<tc>, window_params = [{transform_indices = @transform_0, window_bounds = array<i64: 1, 4, 1, 256>}, {transform_indices = @transform_1, window_bounds = array<i64: 1, 1, 256>}, {transform_indices = @transform_2, window_bounds = array<i64: 1, 1, 1, 1>}]} {
    %c0_i32 = arith.constant 0 : i32
    %0 = arith.cmpi eq, %arg2, %c0_i32 : i32
    %1 = arith.extui %0 : i1 to i32
    %c0_i32_0 = arith.constant 0 : i32
    %2 = arith.cmpi ne, %1, %c0_i32_0 : i32
    scf.if %2 {
      %cst_43 = arith.constant 0.000000e+00 : f32
      %68 = vector.broadcast %cst_43 : f32 to vector<1x256xf32>
      %c0_44 = arith.constant 0 : index
      %c0_45 = arith.constant 0 : index
      %69 = vector.load %arg7[%c0_44, %c0_45] : memref<1x256xf32, #tpu.memory_space<vmem>>, vector<1x256xf32>
      tpu.vector_store %arg7[%c0_44, %c0_45], %68 {strides = array<i32>} : memref<1x256xf32, #tpu.memory_space<vmem>>, vector<1x256xf32>,
    } else {
    }
    %c0 = arith.constant 0 : index
    %c0_1 = arith.constant 0 : index
    %c0_2 = arith.constant 0 : index
    %3 = vector.load %arg5[%c0, %c0_1, %c0_2] : memref<1x1x256xi32, #tpu.memory_space<vmem>>, vector<1x1x256xi32>
    %4 = vector.shape_cast %3 : vector<1x1x256xi32> to vector<1x256xi32>
    %c0_3 = arith.constant 0 : index
    %c0_4 = arith.constant 0 : index
    %c0_5 = arith.constant 0 : index
    %c0_6 = arith.constant 0 : index
    %5 = vector.load %arg4[%c0_3, %c0_4, %c0_5, %c0_6] : memref<1x4x1x256xf32, #tpu.memory_space<vmem>>, vector<1x1x1x256xf32>
    %6 = vector.shape_cast %5 : vector<1x1x1x256xf32> to vector<1x256xf32>
    %c0_7 = arith.constant 0 : index
    %c1 = arith.constant 1 : index
    %c0_8 = arith.constant 0 : index
    %c0_9 = arith.constant 0 : index
    %7 = vector.load %arg4[%c0_7, %c1, %c0_8, %c0_9] : memref<1x4x1x256xf32, #tpu.memory_space<vmem>>, vector<1x1x1x256xf32>
    %8 = vector.shape_cast %7 : vector<1x1x1x256xf32> to vector<1x256xf32>
    %9 = arith.maximumf %6, %8 : vector<1x256xf32>
    %c0_10 = arith.constant 0 : index
    %c2 = arith.constant 2 : index
    %c0_11 = arith.constant 0 : index
    %c0_12 = arith.constant 0 : index
    %10 = vector.load %arg4[%c0_10, %c2, %c0_11, %c0_12] : memref<1x4x1x256xf32, #tpu.memory_space<vmem>>, vector<1x1x1x256xf32>
    %11 = vector.shape_cast %10 : vector<1x1x1x256xf32> to vector<1x256xf32>
    %12 = arith.maximumf %9, %11 : vector<1x256xf32>
    %c0_13 = arith.constant 0 : index
    %c3 = arith.constant 3 : index
    %c0_14 = arith.constant 0 : index
    %c0_15 = arith.constant 0 : index
    %13 = vector.load %arg4[%c0_13, %c3, %c0_14, %c0_15] : memref<1x4x1x256xf32, #tpu.memory_space<vmem>>, vector<1x1x1x256xf32>
    %14 = vector.shape_cast %13 : vector<1x1x1x256xf32> to vector<1x256xf32>
    %15 = arith.maximumf %12, %14 : vector<1x256xf32>
    %cst = arith.constant 0.000000e+00 : f32
    %16 = vector.broadcast %cst : f32 to vector<1x256xf32>
    %cst_16 = arith.constant 0.000000e+00 : f32
    %17 = vector.broadcast %cst_16 : f32 to vector<1x256xf32>
    %c0_17 = arith.constant 0 : index
    %c0_18 = arith.constant 0 : index
    %c0_19 = arith.constant 0 : index
    %c0_20 = arith.constant 0 : index
    %18 = vector.load %arg4[%c0_17, %c0_18, %c0_19, %c0_20] : memref<1x4x1x256xf32, #tpu.memory_space<vmem>>, vector<1x1x1x256xf32>
    %19 = vector.shape_cast %18 : vector<1x1x1x256xf32> to vector<1x256xf32>
    %20 = arith.subf %19, %15 : vector<1x256xf32>
    %21 = math.exp %20 : vector<1x256xf32>
    %22 = arith.addf %16, %21 : vector<1x256xf32>
    %c0_i32_21 = arith.constant 0 : i32
    %23 = vector.broadcast %c0_i32_21 : i32 to vector<1x256xi32>
    %24 = arith.cmpi eq, %4, %23 : vector<1x256xi32>
    %25 = arith.select %24, %19, %17 : vector<1x256xi1>, vector<1x256xf32>
    %c0_22 = arith.constant 0 : index
    %c1_23 = arith.constant 1 : index
    %c0_24 = arith.constant 0 : index
    %c0_25 = arith.constant 0 : index
    %26 = vector.load %arg4[%c0_22, %c1_23, %c0_24, %c0_25] : memref<1x4x1x256xf32, #tpu.memory_space<vmem>>, vector<1x1x1x256xf32>
    %27 = vector.shape_cast %26 : vector<1x1x1x256xf32> to vector<1x256xf32>
    %28 = arith.subf %27, %15 : vector<1x256xf32>
    %29 = math.exp %28 : vector<1x256xf32>
    %30 = arith.addf %22, %29 : vector<1x256xf32>
    %c1_i32 = arith.constant 1 : i32
    %31 = vector.broadcast %c1_i32 : i32 to vector<1x256xi32>
    %32 = arith.cmpi eq, %4, %31 : vector<1x256xi32>
    %33 = arith.select %32, %27, %25 : vector<1x256xi1>, vector<1x256xf32>
    %c0_26 = arith.constant 0 : index
    %c2_27 = arith.constant 2 : index
    %c0_28 = arith.constant 0 : index
    %c0_29 = arith.constant 0 : index
    %34 = vector.load %arg4[%c0_26, %c2_27, %c0_28, %c0_29] : memref<1x4x1x256xf32, #tpu.memory_space<vmem>>, vector<1x1x1x256xf32>
    %35 = vector.shape_cast %34 : vector<1x1x1x256xf32> to vector<1x256xf32>
    %36 = arith.subf %35, %15 : vector<1x256xf32>
    %37 = math.exp %36 : vector<1x256xf32>
    %38 = arith.addf %30, %37 : vector<1x256xf32>
    %c2_i32 = arith.constant 2 : i32
    %39 = vector.broadcast %c2_i32 : i32 to vector<1x256xi32>
    %40 = arith.cmpi eq, %4, %39 : vector<1x256xi32>
    %41 = arith.select %40, %35, %33 : vector<1x256xi1>, vector<1x256xf32>
    %c0_30 = arith.constant 0 : index
    %c3_31 = arith.constant 3 : index
    %c0_32 = arith.constant 0 : index
    %c0_33 = arith.constant 0 : index
    %42 = vector.load %arg4[%c0_30, %c3_31, %c0_32, %c0_33] : memref<1x4x1x256xf32, #tpu.memory_space<vmem>>, vector<1x1x1x256xf32>
    %43 = vector.shape_cast %42 : vector<1x1x1x256xf32> to vector<1x256xf32>
    %44 = arith.subf %43, %15 : vector<1x256xf32>
    %45 = math.exp %44 : vector<1x256xf32>
    %46 = arith.addf %38, %45 : vector<1x256xf32>
    %c3_i32 = arith.constant 3 : i32
    %47 = vector.broadcast %c3_i32 : i32 to vector<1x256xi32>
    %48 = arith.cmpi eq, %4, %47 : vector<1x256xi32>
    %49 = arith.select %48, %43, %41 : vector<1x256xi1>, vector<1x256xf32>
    %50 = arith.subf %49, %15 : vector<1x256xf32>
    %51 = math.log %46 : vector<1x256xf32>
    %52 = arith.subf %50, %51 : vector<1x256xf32>
    %53 = math.exp %52 : vector<1x256xf32>
    %cst_34 = arith.constant 1.000000e-10 : f32
    %54 = vector.broadcast %cst_34 : f32 to vector<1x256xf32>
    %55 = arith.addf %53, %54 : vector<1x256xf32>
    %cst_35 = arith.constant 1.000000e+00 : f32
    %56 = vector.broadcast %cst_35 : f32 to vector<1x256xf32>
    %57 = arith.subf %56, %55 : vector<1x256xf32>
    %58 = arith.mulf %57, %57 : vector<1x256xf32>
    %cst_36 = arith.constant -1.000000e+00 : f32
    %59 = vector.broadcast %cst_36 : f32 to vector<1x256xf32>
    %60 = arith.mulf %59, %58 : vector<1x256xf32>
    %61 = arith.mulf %60, %52 : vector<1x256xf32>
    %c0_37 = arith.constant 0 : index
    %c0_38 = arith.constant 0 : index
    %62 = vector.load %arg7[%c0_37, %c0_38] : memref<1x256xf32, #tpu.memory_space<vmem>>, vector<1x256xf32>
    %63 = arith.addf %62, %61 : vector<1x256xf32>
    %c0_39 = arith.constant 0 : index
    %c0_40 = arith.constant 0 : index
    %64 = vector.load %arg7[%c0_39, %c0_40] : memref<1x256xf32, #tpu.memory_space<vmem>>, vector<1x256xf32>
    tpu.vector_store %arg7[%c0_39, %c0_40], %63 {strides = array<i32>} : memref<1x256xf32, #tpu.memory_space<vmem>>, vector<1x256xf32>,
    %c0_i32_41 = arith.constant 0 : i32
    %65 = arith.cmpi eq, %arg2, %c0_i32_41 : i32
    %66 = arith.extui %65 : i1 to i32
    %c0_i32_42 = arith.constant 0 : i32
    %67 = arith.cmpi ne, %66, %c0_i32_42 : i32
    scf.if %67 {
      %c0_43 = arith.constant 0 : index
      %c0_44 = arith.constant 0 : index
      %68 = vector.load %arg7[%c0_43, %c0_44] : memref<1x256xf32, #tpu.memory_space<vmem>>, vector<1x256xf32>
      %69 = vector.shape_cast %68 : vector<1x256xf32> to vector<1x1x256xf32>
      %cst_45 = arith.constant dense<0.000000e+00> : vector<1xf32>
      %70 = vector.multi_reduction <add>, %69, %cst_45 [1, 2] : vector<1x1x256xf32> to vector<1xf32>
      %71 = vector.shape_cast %70 : vector<1xf32> to vector<1x1x1xf32>
      %72 = vector.extract %71[0, 0, 0] : f32 from vector<1x1x1xf32>
      %73 = vector.broadcast %72 : f32 to vector<1x1xf32>
      %c0_46 = arith.constant 0 : index
      %c0_47 = arith.constant 0 : index
      %c0_48 = arith.constant 0 : index
      %c0_49 = arith.constant 0 : index
      %74 = vector.load %arg6[%c0_46, %c0_47, %c0_48, %c0_49] : memref<1x1x1x1xf32, #tpu.memory_space<vmem>>, vector<1x1x1x1xf32>
      %75 = vector.shape_cast %74 : vector<1x1x1x1xf32> to vector<1x1xf32>
      %76 = vector.shape_cast %73 : vector<1x1xf32> to vector<1x1x1x1xf32>
      tpu.vector_store %arg6[%c0_46, %c0_47, %c0_48, %c0_49], %76 {strides = array<i32>} : memref<1x1x1x1xf32, #tpu.memory_space<vmem>>, vector<1x1x1x1xf32>,
    } else {
    }
    return
  }
  func.func @transform_0(%arg0: i32, %arg1: i32, %arg2: i32, %arg3: memref<4xf32, #tpu.memory_space<smem>>) -> (i32, i32, i32, i32) {
    %c1_i32 = arith.constant 1 : i32
    %0 = arith.muli %arg1, %c1_i32 : i32
    %1 = arith.addi %0, %arg2 : i32
    %c0_i32 = arith.constant 0 : i32
    %c0_i32_0 = arith.constant 0 : i32
    %c0_i32_1 = arith.constant 0 : i32
    return %arg0, %c0_i32, %1, %c0_i32_0 : i32, i32, i32, i32
  }
  func.func @transform_1(%arg0: i32, %arg1: i32, %arg2: i32, %arg3: memref<4xf32, #tpu.memory_space<smem>>) -> (i32, i32, i32) {
    %c1_i32 = arith.constant 1 : i32
    %0 = arith.muli %arg1, %c1_i32 : i32
    %1 = arith.addi %0, %arg2 : i32
    %c0_i32 = arith.constant 0 : i32
    %c0_i32_0 = arith.constant 0 : i32
    return %arg0, %1, %c0_i32 : i32, i32, i32
  }
  func.func @transform_2(%arg0: i32, %arg1: i32, %arg2: i32, %arg3: memref<4xf32, #tpu.memory_space<smem>>) -> (i32, i32, i32, i32) {
    %c0_i32 = arith.constant 0 : i32
    %c0_i32_0 = arith.constant 0 : i32
    %c0_i32_1 = arith.constant 0 : i32
    return %arg0, %arg1, %c0_i32, %c0_i32_0 : i32, i32, i32, i32
  }
}

</mosaic_0001>

<llo_original>
// kernel: tpu_custom_call.1
$region0: #{tpu_custom_call.1}
  #allocation0 [shape = 'u32[]', space=smem, size = 0x4, offset = 0x4, fixed_abs, tag = 'smem constant byte address 0x4 - core index']
  #allocation1 [shape = 'u32[144,128]{1,0:T(1,128)}', space=vmem, size = 0x12000, scoped, tag = 'internal scratch']
  #allocation2 [shape = 'f32[1,256]{1,0:T(1,128)}', space=vmem, size = 0x400, scoped, tag = 'scratch operand']
  #allocation3 [shape = 's32[1]{0}', space=sflag, size = 0x4, scoped, tag = 'scoped memory for tpu_custom_call.1']
  #allocation4 [shape = 'u8[512]{0}', space=smem, size = 0x200, scoped, tag = 'prefetched SMEM operand 0']
  %s0 = inlined_call_operand.hbm [shape: f32[4], index: 0, kind: input, shape index: {}]
  %s1 = inlined_call_operand.hbm [shape: f32[2,4,1,256], index: 1, kind: input, shape index: {}]
  %s2 = inlined_call_operand.vmem [shape: s32[2,1,256], index: 2, kind: input, shape index: {}]
  %s3 = inlined_call_operand.vmem [shape: f32[2,1,1,1], index: 3, kind: output, shape index: {}]
  %s4 = sld [smem:[#allocation0]]
  $region53: #{tpu_custom_call.1} parent=0
    _
  %s6 = ssub.s32 1, %s4
  %s7 = scalar_select 0, %s6, %s4
  %9 = dma.hbm_to_smem %s0, 16, [#allocation4], [#allocation3]
  %10 = dma.done [#allocation3], 16
  %11 = sfence
  $region1: #{tpu_custom_call.1} parent=0
    #allocation5 [shape = 'u8[8192]{0}', space=vmem, size = 0x2000, scoped, tag = 'input window, operand 1']
    #allocation6 [shape = 's32[2]{0}', space=sflag, size = 0x8, scoped, tag = 'scoped memory for tpu_custom_call.1']
    %12 = vsyncpa [#allocation6], 0
    %s13 = scalar_lea.sflag [#allocation6], 1
    %14 = vsyncpa %s13, 0
    loop: start=0, step=1, limit=4
    $region2: #{tpu_custom_call.1} parent=1 // loop_pre_header
      _
    $region3: #{tpu_custom_call.1} parent=1 // loop_header
      %s16 = sphi 0, %s20
      %p17 = scmp.ge.s32.totalorder %s16, 4
      %s23 = sphi 0, %s42
      %s24 = sphi 0, %s38
      %s25 = sphi 0, %s34
      %s26 = sphi 0, %s23
      %s27 = sphi 0, %s24
      %s28 = sphi 0, %s25
      %s29 = sphi 0, %s26
      %s30 = sphi 0, %s27
      %s31 = sphi 0, %s28
      %s49 = sphi 0, %s51
      %s52 = sphi 0, %s49
      %s53 = sphi 0, %s52
      %s69 = sphi 0, %s53
      %s79 = sphi 0, %s81
      %s82 = sphi 0, %s79
      %s83 = sphi 0, %s82
      %s99 = sphi 0, %s83
      %s107 = sphi 0, %s109
      %s110 = sphi 0, %s107
      %s111 = sphi 0, %s110
      %s127 = sphi 0, %s111
    $region4: #{tpu_custom_call.1} parent=1 // loop_header_branch
      %19 = sbr.rel (%p17) target = $region8
    $region5: #{tpu_custom_call.1} parent=1 // loop_body
      %s21 = ssub.s32 %s16, 1
      %s22 = ssub.s32 %s16, 2
      %s32 = sadd.s32 1, %s25
      %p33 = scmp.ge.s32.totalorder %s32, 1
      %s34 = scalar_select %p33, 0, %s32
      %s35 = sadd.s32 1, %s24
      %s36 = scalar_select %p33, %s35, %s24
      %p37 = scmp.ge.s32.totalorder %s36, 1
      %s38 = scalar_select %p37, 0, %s36
      %s39 = sadd.s32 1, %s23
      %s40 = scalar_select %p37, %s39, %s23
      %p41 = scmp.ge.s32.totalorder %s40, 2
      %s42 = scalar_select %p41, 0, %s40
      %s43 = sadd.s32 %s24, %s25
      %s44 = sadd.s32 %s38, %s34
      %s45 = ssub.s32 %s23, %s42
      %s46 = ssub.s32 %s43, %s44
      %s47 = sor.u32 %s45, %s46
      %p48 = scmp.eq.s32.totalorder %s47, 0
      %s50 = sadd.s32 %s49, 1
      %s51 = scalar_select %p48, %s49, %s50
      %p54 = pneg %p48
      %p55 = scmp.eq.s32.totalorder %s16, 1
      %p56 = por %p54, %p55
      %p57 = scmp.ne.s32.totalorder %s49, %s52
      %p58 = scmp.eq.s32.totalorder %s16, 0
      %p59 = por %p57, %p58
      %p60 = scmp.ne.s32.totalorder %s49, %s52
      %p61 = scmp.eq.s32.totalorder %s21, 1
      %p62 = por %p60, %p61
      %p63 = scmp.ne.s32.totalorder %s52, %s53
      %p64 = scmp.eq.s32.totalorder %s21, 0
      %p65 = por %p63, %p64
      %p66 = scmp.ne.s32.totalorder %s52, %s53
      %p67 = scmp.eq.s32.totalorder %s22, 1
      %p68 = por %p66, %p67
      %p70 = scmp.ne.s32.totalorder %s53, %s69
      %p71 = scmp.eq.s32.totalorder %s22, 0
      %p72 = por %p70, %p71
      %s73 = sadd.s32 %s24, %s25
      %s74 = sadd.s32 %s38, %s34
      %s75 = ssub.s32 %s23, %s42
      %s76 = ssub.s32 %s73, %s74
      %s77 = sor.u32 %s75, %s76
      %p78 = scmp.eq.s32.totalorder %s77, 0
      %s80 = sadd.s32 %s79, 1
      %s81 = scalar_select %p78, %s79, %s80
      %p84 = pneg %p78
      %p85 = scmp.eq.s32.totalorder %s16, 1
      %p86 = por %p84, %p85
      %p87 = scmp.ne.s32.totalorder %s79, %s82
      %p88 = scmp.eq.s32.totalorder %s16, 0
      %p89 = por %p87, %p88
      %p90 = scmp.ne.s32.totalorder %s79, %s82
      %p91 = scmp.eq.s32.totalorder %s21, 1
      %p92 = por %p90, %p91
      %p93 = scmp.ne.s32.totalorder %s82, %s83
      %p94 = scmp.eq.s32.totalorder %s21, 0
      %p95 = por %p93, %p94
      %p96 = scmp.ne.s32.totalorder %s82, %s83
      %p97 = scmp.eq.s32.totalorder %s22, 1
      %p98 = por %p96, %p97
      %p100 = scmp.ne.s32.totalorder %s83, %s99
      %p101 = scmp.eq.s32.totalorder %s22, 0
      %p102 = por %p100, %p101
      %s103 = ssub.s32 %s23, %s42
      %s104 = ssub.s32 %s24, %s38
      %s105 = sor.u32 %s103, %s104
      %p106 = scmp.eq.s32.totalorder %s105, 0
      %s108 = sadd.s32 %s107, 1
      %s109 = scalar_select %p106, %s107, %s108
      %p112 = pneg %p106
      %p113 = scmp.eq.s32.totalorder %s16, 1
      %p114 = por %p112, %p113
      %p115 = scmp.ne.s32.totalorder %s107, %s110
      %p116 = scmp.eq.s32.totalorder %s16, 0
      %p117 = por %p115, %p116
      %p118 = scmp.ne.s32.totalorder %s107, %s110
      %p119 = scmp.eq.s32.totalorder %s21, 1
      %p120 = por %p118, %p119
      %p121 = scmp.ne.s32.totalorder %s110, %s111
      %p122 = scmp.eq.s32.totalorder %s21, 0
      %p123 = por %p121, %p122
      %p124 = scmp.ne.s32.totalorder %s110, %s111
      %p125 = scmp.eq.s32.totalorder %s22, 1
      %p126 = por %p124, %p125
      %p128 = scmp.ne.s32.totalorder %s111, %s127
      %p129 = scmp.eq.s32.totalorder %s22, 0
      %p130 = por %p128, %p129
      %p131 = scmp.le.s32.totalorder 1, %s16
      %p132 = scmp.lt.s32.totalorder %s16, 3
      %p133 = pnand %p131, %p132
      %p134 = pneg %p133
      // Predicated region
      $region9: #{tpu_custom_call.1} parent=5 // pred_check
        _
      $region10: #{tpu_custom_call.1} parent=5 // pred_check_branch
        %136 = sbr.rel (%p133) target = $region12
      $region11: #{tpu_custom_call.1} parent=5 // pred_region
        %s137 = ssub.s32 %s16, 1
      $region12: #{tpu_custom_call.1} parent=5 // pred_fallthru
        _
      %p138 = scmp.lt.s32.totalorder %s16, 2
      // Predicated region
      $region13: #{tpu_custom_call.1} parent=5 // pred_check
        %p139 = pneg %p138
      $region14: #{tpu_custom_call.1} parent=5 // pred_check_branch
        %141 = sbr.rel (%p139) target = $region16
      $region15: #{tpu_custom_call.1} parent=5 // pred_region
        // Predicated region
        $region17: #{tpu_custom_call.1} parent=15 // pred_check
          %p142 = pneg %p59
        $region18: #{tpu_custom_call.1} parent=15 // pred_check_branch
          %144 = sbr.rel (%p142) target = $region20
        $region19: #{tpu_custom_call.1} parent=15 // pred_region
          %s145 = sand.u32 %s49, 1
          %s146 = scalar_lea.sflag [#allocation6], %s145
          %s147 = sand.u32 %s49, 1
          %s148 = smul.addr %s147, 8
          %s149 = scalar_lea.vmem [#allocation5], %s148
          %s150 = sadd.s32 %s24, %s25
          %s152 = ssub.s32 128, 128
          %153 = vsyncadd %s146, %s152
          %s154 = smul.addr %s150, 2
          %s155 = smul.addr %s23, 8
          %s156 = sadd.s32 %s154, %s155
          %s157 = smul.addr %s156, 16
          %s158 = scalar_lea.hbm %s1, %s157
          %s159 = sshll.u32 %s149, 4
          %s160 = int_to_ptr.vmem [resolvable:$true] %s159
          %165 = dma.hbm_to_vmem [thread:$0]  %s158, 128, %s160, %s146, 32, 32, 2
        $region20: #{tpu_custom_call.1} parent=15 // pred_fallthru
          _
        // Predicated region
        $region21: #{tpu_custom_call.1} parent=15 // pred_check
          %p166 = pneg %p89
        $region22: #{tpu_custom_call.1} parent=15 // pred_check_branch
          %168 = sbr.rel (%p166) target = $region24
        $region23: #{tpu_custom_call.1} parent=15 // pred_region
          %s169 = sadd.s32 %s24, %s25
          %p170 = scmp.lt.s32.totalorder %s23, 1
          %s171 = scalar_select %p170, %s23, 1
          %p172 = scmp.lt.s32.totalorder %s169, 0
          %s173 = scalar_select %p172, %s169, 0
          %s174 = smul.addr %s173, 2
          %s175 = smul.addr %s171, 2
          %s176 = sadd.s32 %s174, %s175
          %s177 = scalar_lea.vmem %s2, %s176
          %s178 = sadd.s32 %s24, %s25
        $region24: #{tpu_custom_call.1} parent=15 // pred_fallthru
          _
      $region16: #{tpu_custom_call.1} parent=5 // pred_fallthru
        _
      %p179 = scmp.le.s32.totalorder 1, %s16
      %p180 = scmp.lt.s32.totalorder %s16, 3
      %p181 = pnand %p179, %p180
      %p182 = pneg %p181
      // Predicated region
      $region25: #{tpu_custom_call.1} parent=5 // pred_check
        _
      $region26: #{tpu_custom_call.1} parent=5 // pred_check_branch
        %184 = sbr.rel (%p181) target = $region28
      $region27: #{tpu_custom_call.1} parent=5 // pred_region
        %s185 = ssub.s32 %s16, 1
        %s186 = sand.u32 %s52, 1
        %s187 = scalar_lea.sflag [#allocation6], %s186
        %s188 = sand.u32 %s52, 1
        %s189 = smul.addr %s188, 8
        %s190 = scalar_lea.vmem [#allocation5], %s189
        // Predicated region
        $region29: #{tpu_custom_call.1} parent=27 // pred_check
          %p191 = pneg %p65
        $region30: #{tpu_custom_call.1} parent=27 // pred_check_branch
          %193 = sbr.rel (%p191) target = $region32
        $region31: #{tpu_custom_call.1} parent=27 // pred_region
          %194 = dma.done %s187, 128
        $region32: #{tpu_custom_call.1} parent=27 // pred_fallthru
          _
        %s195 = sand.u32 %s52, 1
        %s196 = scalar_lea.sflag [#allocation6], %s195
        %s197 = sand.u32 %s52, 1
        %s198 = smul.addr %s197, 8
        %s199 = scalar_lea.vmem [#allocation5], %s198
        %p200 = pneg %p65
        %p201 = pneg %p62
        %s202 = sadd.s32 %s27, %s28
        %p203 = scmp.lt.s32.totalorder %s26, 1
        %s204 = scalar_select %p203, %s26, 1
        %p205 = scmp.lt.s32.totalorder %s202, 0
        %s206 = scalar_select %p205, %s202, 0
        %s207 = smul.addr %s206, 2
        %s208 = smul.addr %s204, 2
        %s209 = sadd.s32 %s207, %s208
        %s210 = scalar_lea.vmem %s2, %s209
        %p211 = pneg %p95
        %p212 = pneg %p92
        %p213 = pneg %p123
        %p214 = pneg %p120
        %p215 = scmp.lt.s32.totalorder %s26, 1
        %s216 = scalar_select %p215, %s26, 1
        %p217 = scmp.lt.s32.totalorder %s27, 0
        %s218 = scalar_select %p217, %s27, 0
        %s219 = sadd.s32 %s218, %s216
        %s220 = scalar_lea.vmem %s3, %s219
        %s221 = sadd.s32 %s27, %s28
        %s222 = sadd.s32 %s27, %s28
        %p223 = scmp.lt.s32.totalorder %s26, 1
        %s224 = scalar_select %p223, %s26, 1
        %p225 = scmp.lt.s32.totalorder %s222, 0
        %s226 = scalar_select %p225, %s222, 0
        %s227 = smul.addr %s226, 2
        %s228 = smul.addr %s224, 2
        %s229 = sadd.s32 %s227, %s228
        %s230 = scalar_lea.vmem %s2, %s229
        %s231 = sadd.s32 %s27, %s28
        %p232 = scmp.lt.s32.totalorder %s26, 1
        %s233 = scalar_select %p232, %s26, 1
        %p234 = scmp.lt.s32.totalorder %s27, 0
        %s235 = scalar_select %p234, %s27, 0
        %s236 = sadd.s32 %s235, %s233
        %s237 = scalar_lea.vmem %s3, %s236
        %p238 = scmp.eq.s32.totalorder %s28, 0
        // Predicated region
        $region33: #{tpu_custom_call.1} parent=27 // pred_check
          %p239 = pneg %p238
        $region34: #{tpu_custom_call.1} parent=27 // pred_check_branch
          %241 = sbr.rel (%p239) target = $region36
        $region35: #{tpu_custom_call.1} parent=27 // pred_region
          %v242 = vlaneseq
          %vm243 = vcmp.ge.s32.totalorder %v242, 0
          %vm244 = vcmp.lt.s32.totalorder %v242, 256
          %vm245 = vmand %vm243, %vm244
          %246 = vst.msk [vmem:[#allocation2] sm:$0x3] %vm245, 0.0
        $region36: #{tpu_custom_call.1} parent=27 // pred_fallthru
          _
        %v247 = vld [vmem:[%s230] sm:$0x3]
        %v248 = vld [vmem:[%s190] sm:$0x3]
        %s249 = scalar_lea.vmem %s190, 2 [#allocation5]
        %v250 = vld [vmem:[%s249] sm:$0x3]
        %v251 = vmax.f32 %v248, %v250
        %s252 = scalar_lea.vmem %s190, 4 [#allocation5]
        %v253 = vld [vmem:[%s252] sm:$0x3]
        %v254 = vmax.f32 %v251, %v253
        %s255 = scalar_lea.vmem %s190, 6 [#allocation5]
        %v256 = vld [vmem:[%s255] sm:$0x3]
        %v257 = vmax.f32 %v254, %v256
        %v258 = vsub.f32 %v248, %v257
        %v259 = vmul.f32 %v258, 1.442695
        %v260 = vpow.pop %v259
        %v261 = vadd.f32 %v260, 0.0
        %vm262 = vcmp.eq.s32.totalorder %v247, 0
        %v263 = vsel %vm262, %v248, 0.0
        %v264 = vsub.f32 %v250, %v257
        %v265 = vmul.f32 %v264, 1.442695
        %v266 = vpow.pop %v265
        %v267 = vadd.f32 %v261, %v266
        %vm268 = vcmp.eq.s32.totalorder %v247, 1
        %v269 = vsel %vm268, %v250, %v263
        %v270 = vsub.f32 %v253, %v257
        %v271 = vmul.f32 %v270, 1.442695
        %v272 = vpow.pop %v271
        %v273 = vadd.f32 %v267, %v272
        %vm274 = vcmp.eq.s32.totalorder %v247, 2
        %v275 = vsel %vm274, %v253, %v269
        %v276 = vsub.f32 %v256, %v257
        %v277 = vmul.f32 %v276, 1.442695
        %v278 = vpow.pop %v277
        %v279 = vadd.f32 %v273, %v278
        %vm280 = vcmp.eq.s32.totalorder %v247, 3
        %v281 = vsel %vm280, %v256, %v275
        %v282 = vsub.f32 %v281, %v257
        %v283 = vlog2.pop %v279
        %v284 = vmul.f32 %v283, 0.6931472
        %v285 = vsub.f32 %v282, %v284
        %v286 = vmul.f32 %v285, 1.442695
        %v287 = vpow.pop %v286
        %v288 = vadd.f32 %v287, 1e-10
        %v289 = vsub.f32 1.0, %v288
        %v290 = vmul.f32 %v289, %v289
        %v291 = vmul.f32 %v290, -1.0
        %v292 = vmul.f32 %v291, %v285
        %v293 = vld [vmem:[#allocation2] sm:$0x3]
        %v294 = vadd.f32 %v293, %v292
        %v295 = vlaneseq
        %vm296 = vcmp.ge.s32.totalorder %v295, 0
        %vm297 = vcmp.lt.s32.totalorder %v295, 256
        %vm298 = vmand %vm296, %vm297
        %299 = vst.msk [vmem:[#allocation2] sm:$0x3] %vm298, %v294
        // Predicated region
        $region37: #{tpu_custom_call.1} parent=27 // pred_check
          %p300 = pneg %p238
        $region38: #{tpu_custom_call.1} parent=27 // pred_check_branch
          %302 = sbr.rel (%p300) target = $region40
        $region39: #{tpu_custom_call.1} parent=27 // pred_region
          %v303 = vld [vmem:[#allocation2] sm:$0x3]
          %v305 = vlaneseq
          %v306 = vshrl.u32 %v305, 7
          %v307 = vsub.s32 0, %v306
          %v308 = vrot.slane %v303, %v307
          %v309 = vlaneseq
          %v310 = vshrl.u32 %v309, 7
          %v311 = vsub.s32 1, %v310
          %v312 = vrot.slane %v303, %v311
          %vm315 = vcmask 1040384
          %v316 = vsel %vm315, %v308, 0.0
          %v317 = vsel %vm315, %v312, 0.0
          %v318 = vadd.f32 %v316, %v317
          %319 = vadd.xlane.f32.xlu0 %v318
          %v320 = vpop.xlane.xlu0 %319
          %v321 = vrot.slane %v320, 4
          %v322 = vadd.f32 %v320, %v321
          %v323 = vrot.slane %v322, 2
          %v324 = vadd.f32 %v322, %v323
          %v325 = vrot.slane %v324, 1
          %v326 = vadd.f32 %v324, %v325
          %s327 = vtos %v326
          %v328 = vstv %s327
          %vm329 = vcmask 0
          %330 = vst.msk [vmem:[%s237] sm:$0x1] %vm329, %v328
        $region40: #{tpu_custom_call.1} parent=27 // pred_fallthru
          _
        %p331 = scmp.lt.s32.totalorder %s26, 1
        %s332 = scalar_select %p331, %s26, 1
        %p333 = scmp.lt.s32.totalorder %s27, 0
        %s334 = scalar_select %p333, %s27, 0
        %s335 = sadd.s32 %s334, %s332
        %s336 = scalar_lea.vmem %s3, %s335
        // Predicated region
        $region41: #{tpu_custom_call.1} parent=27 // pred_check
          %p337 = pneg %p120
        $region42: #{tpu_custom_call.1} parent=27 // pred_check_branch
          %339 = sbr.rel (%p337) target = $region44
        $region43: #{tpu_custom_call.1} parent=27 // pred_region
          _
        $region44: #{tpu_custom_call.1} parent=27 // pred_fallthru
          _
      $region28: #{tpu_custom_call.1} parent=5 // pred_fallthru
        _
      %p340 = scmp.le.s32.totalorder 2, %s16
      // Predicated region
      $region45: #{tpu_custom_call.1} parent=5 // pred_check
        %p341 = pneg %p340
      $region46: #{tpu_custom_call.1} parent=5 // pred_check_branch
        %343 = sbr.rel (%p341) target = $region48
      $region47: #{tpu_custom_call.1} parent=5 // pred_region
        %s344 = ssub.s32 %s16, 2
        // Predicated region
        $region49: #{tpu_custom_call.1} parent=47 // pred_check
          %p345 = pneg %p126
        $region50: #{tpu_custom_call.1} parent=47 // pred_check_branch
          %347 = sbr.rel (%p345) target = $region52
        $region51: #{tpu_custom_call.1} parent=47 // pred_region
          %p348 = scmp.lt.s32.totalorder %s29, 1
          %s349 = scalar_select %p348, %s29, 1
          %p350 = scmp.lt.s32.totalorder %s30, 0
          %s351 = scalar_select %p350, %s30, 0
          %s352 = sadd.s32 %s351, %s349
          %s353 = scalar_lea.vmem %s3, %s352
        $region52: #{tpu_custom_call.1} parent=47 // pred_fallthru
          _
      $region48: #{tpu_custom_call.1} parent=5 // pred_fallthru
        _
    $region6: #{tpu_custom_call.1} parent=1 // loop_footer
      %s20 = sadd.s32 1, %s16
    $region7: #{tpu_custom_call.1} parent=1 // loop_footer_branch
      %15 = sbr.rel target = $region3
    $region8: #{tpu_custom_call.1} parent=1 // loop_exit
      _
    %354 = vsyncpa [#allocation6], 1
    %s355 = scalar_lea.sflag [#allocation6], 1
    %356 = vsyncpa %s355, 1

</llo_original>
